<compile_context>
chip_gen: v7x
topology: tpu7x:2x2x1
jax: 0.10.0
libtpu: 0.0.40
codegen_flags: <defaults>
</compile_context>

<pallas_src>
import functools

import jax
import jax.numpy as jnp
from jax.experimental import pallas as pl
from jax.experimental.pallas import tpu as pltpu


def _round_up(x, m):
    return (x + m - 1) // m * m


_VMEM_BUDGET = 40 * 1024 * 1024   # tile-selection budget (headroom < v7x 64 MiB)
_VMEM_LIMIT = 48 * 1024 * 1024    # explicit scoped-VMEM limit for Mosaic


# ----------------------------- Pallas kernels ------------------------------
# Grid = (M_blocks, K_blocks); K (reduction) is last and "arbitrary", M is
# "parallel" (megacore / dual-TC sharding).  Output-channel panel is a single
# lane-dense block, so the weight index_map is i-independent.

def _mm_bias_act_kernel(a_ref, w_ref, bias_ref, o_ref, acc_ref, *, relu):
    """out = act(a @ w + bias); BN scale pre-folded into w."""
    @pl.when(pl.program_id(1) == 0)
    def _():
        acc_ref[...] = jnp.zeros_like(acc_ref)

    acc_ref[...] += jnp.dot(a_ref[...], w_ref[...],
                            preferred_element_type=jnp.float32)

    @pl.when(pl.program_id(1) == pl.num_programs(1) - 1)
    def _():
        y = acc_ref[...] + bias_ref[...]
        if relu:
            y = jnp.maximum(y, 0.0)
        o_ref[...] = y.astype(o_ref.dtype)


def _mm_bias_add_relu_kernel(a_ref, w_ref, bias_ref, s_ref, o_ref, acc_ref):
    """out = relu(a @ w + bias + shortcut)  (identity-shortcut path)."""
    @pl.when(pl.program_id(1) == 0)
    def _():
        acc_ref[...] = jnp.zeros_like(acc_ref)

    acc_ref[...] += jnp.dot(a_ref[...], w_ref[...],
                            preferred_element_type=jnp.float32)

    @pl.when(pl.program_id(1) == pl.num_programs(1) - 1)
    def _():
        y = acc_ref[...] + bias_ref[...] + s_ref[...].astype(jnp.float32)
        o_ref[...] = jnp.maximum(y, 0.0).astype(o_ref.dtype)


# ------------------------------ kernel wrapper ------------------------------

def _pick_tiles(M, K, Ncols, out_itemsize, has_shortcut):
    """Choose (tm, Np, tk) against the VMEM budget.

    tm: minimal M padding, prefer larger (256-multiples fill v7x's 2x256 MXU
        and give >=2 parallel blocks on real ResNet shapes).
    Np: full padded Cout (lane-dense single panel, no j grid axis).
    tk: whole padded K if it fits (single reduction step, weight panel
        VMEM-resident across M blocks), else largest fitting 128-multiple.
    """
    tm = min((512, 384, 256, 128), key=lambda t: (_round_up(M, t) - M, -t))
    Np = _round_up(Ncols, 128)
    Kp128 = _round_up(K, 128)

    def footprint(tk):
        a = 2 * tm * tk * 2                       # double-buffered bf16 A tile
        w = 2 * tk * Np * 2                       # double-buffered bf16 W panel
        out = 2 * tm * Np * out_itemsize          # double-buffered output tile
        acc = tm * Np * 4                         # f32 accumulator scratch
        bias = 2 * Np * 4
        sc = 2 * tm * Np * 2 if has_shortcut else 0
        return a + w + out + acc + bias + sc

    if footprint(Kp128) <= _VMEM_BUDGET:
        tk = Kp128
    else:
        tk = 128
        for cand in (4096, 2048, 1024, 512, 256):
            if cand < Kp128 and footprint(cand) <= _VMEM_BUDGET:
                tk = cand
                break
    return tm, Np, tk


def fused_matmul_bias(a, w, bias, *, relu=True, shortcut=None,
                      out_dtype=jnp.bfloat16):
    """out = epilogue(a @ w + bias [+ shortcut]) via a tiled Pallas kernel.

    Operands are zero-padded to tile-aligned, lane-dense shapes and cast to
    bf16 for the MXU; accumulation is f32 in VMEM scratch.  BN scaling is
    expected to be pre-folded into `w` / `bias` by the caller.
    """
    M, K = a.shape
    Kw, Ncols = w.shape
    assert K == Kw

    tm, Np, tk = _pick_tiles(M, K, Ncols, jnp.dtype(out_dtype).itemsize,
                             shortcut is not None)
    Mp = _round_up(M, tm)
    Kp = _round_up(K, tk)

    def pad2(x, rows, cols, dtype):
        r, c = x.shape
        return jnp.pad(x.astype(dtype), ((0, rows - r), (0, cols - c)))

    a_p = pad2(a, Mp, Kp, jnp.bfloat16)
    w_p = pad2(w, Kp, Np, jnp.bfloat16)
    bias_p = pad2(bias.reshape(1, Ncols), 1, Np, jnp.float32)

    grid = (Mp // tm, Kp // tk)
    a_spec = pl.BlockSpec((tm, tk), lambda i, k: (i, k))
    w_spec = pl.BlockSpec((tk, Np), lambda i, k: (k, 0))     # i-independent
    bias_spec = pl.BlockSpec((1, Np), lambda i, k: (0, 0))
    out_spec = pl.BlockSpec((tm, Np), lambda i, k: (i, 0))

    out_shape = jax.ShapeDtypeStruct((Mp, Np), out_dtype)
    scratch = [pltpu.VMEM((tm, Np), jnp.float32)]
    cparams = pltpu.CompilerParams(
        dimension_semantics=("parallel", "arbitrary"),
        vmem_limit_bytes=_VMEM_LIMIT)

    if shortcut is not None:
        s_p = pad2(shortcut, Mp, Np, jnp.bfloat16)
        out = pl.pallas_call(
            _mm_bias_add_relu_kernel,
            out_shape=out_shape,
            grid=grid,
            in_specs=[a_spec, w_spec, bias_spec,
                      pl.BlockSpec((tm, Np), lambda i, k: (i, 0))],
            out_specs=out_spec,
            scratch_shapes=scratch,
            compiler_params=cparams,
        )(a_p, w_p, bias_p, s_p)
    else:
        out = pl.pallas_call(
            functools.partial(_mm_bias_act_kernel, relu=relu),
            out_shape=out_shape,
            grid=grid,
            in_specs=[a_spec, w_spec, bias_spec],
            out_specs=out_spec,
            scratch_shapes=scratch,
            compiler_params=cparams,
        )(a_p, w_p, bias_p)

    return out[:M, :Ncols]


# ------------------------------- JAX glue -----------------------------------

def _im2col_3x3(x_nhwc, stride):
    """3x3, padding=1 patch extraction.  Returns (N*Ho*Wo, 9*C) and dims."""
    N, H, W, C = x_nhwc.shape
    xp = jnp.pad(x_nhwc, ((0, 0), (1, 1), (1, 1), (0, 0)))
    Ho = (H + 2 - 3) // stride + 1
    Wo = (W + 2 - 3) // stride + 1
    cols = []
    for dy in range(3):
        for dx in range(3):
            cols.append(
                xp[:, dy:dy + stride * (Ho - 1) + 1:stride,
                      dx:dx + stride * (Wo - 1) + 1:stride, :])
    patches = jnp.concatenate(cols, axis=-1)          # (N, Ho, Wo, 9*C)
    return patches.reshape(N * Ho * Wo, 9 * C), (N, Ho, Wo)


def _fold_bn(gamma, beta, mean, var, eps=1e-5):
    scale = gamma / jnp.sqrt(var + eps)
    return scale, beta - mean * scale


def basic_block_forward(x_nchw, params, stride):
    """Matches BasicBlock.forward (inference-mode BN). Returns NCHW, f32."""
    x = jnp.transpose(x_nchw, (0, 2, 3, 1)).astype(jnp.bfloat16)   # NHWC bf16
    N, H, W, Cin = x.shape
    Cout = params["w1"].shape[0]                                   # (Cout,Cin,3,3)

    # conv1 (3x3, stride) + bn1 + relu; BN scale folded into f32 weights.
    a1, (_, Ho, Wo) = _im2col_3x3(x, stride)
    s1, b1 = _fold_bn(params["bn1_gamma"], params["bn1_beta"],
                      params["bn1_mean"], params["bn1_var"])
    w1 = jnp.transpose(params["w1"], (2, 3, 1, 0)).reshape(9 * Cin, Cout)
    w1 = w1 * s1[None, :]                                          # fold in f32
    out1 = fused_matmul_bias(a1, w1, b1, relu=True, out_dtype=jnp.bfloat16)
    out1_nhwc = out1.reshape(N, Ho, Wo, Cout)

    # conv2 (3x3, stride 1) + bn2 + shortcut + relu, fully fused.
    a2, _ = _im2col_3x3(out1_nhwc, 1)
    s2, b2 = _fold_bn(params["bn2_gamma"], params["bn2_beta"],
                      params["bn2_mean"], params["bn2_var"])
    w2 = jnp.transpose(params["w2"], (2, 3, 1, 0)).reshape(9 * Cout, Cout)
    w2 = w2 * s2[None, :]

    if "ws" in params:
        # 1x1-conv (stride) + BN projection shortcut, folded into the same
        # K reduction:  [a2 | xs] @ [w2*s2 ; ws*ss] + (b2 + bs), then ReLU.
        ss, bs = _fold_bn(params["bns_gamma"], params["bns_beta"],
                          params["bns_mean"], params["bns_var"])
        ws = jnp.transpose(params["ws"], (2, 3, 1, 0)).reshape(Cin, Cout)
        ws = ws * ss[None, :]
        xs = x[:, ::stride, ::stride, :].reshape(N * Ho * Wo, Cin)
        a_cat = jnp.concatenate([a2, xs], axis=1)
        w_cat = jnp.concatenate([w2, ws], axis=0)
        out2 = fused_matmul_bias(a_cat, w_cat, b2 + bs, relu=True,
                                 out_dtype=jnp.bfloat16)
    else:
        assert stride == 1 and Cin == Cout, \
            "identity shortcut requires stride==1 and in_planes==block_planes"
        sc = x.reshape(N * H * W, Cin)
        out2 = fused_matmul_bias(a2, w2, b2, shortcut=sc,
                                 out_dtype=jnp.bfloat16)

    out = out2.reshape(N, Ho, Wo, Cout)
    # f32 cast only at the final NCHW transpose (bf16 HBM writeback above).
    return jnp.transpose(out, (0, 3, 1, 2)).astype(jnp.float32)    # NCHW


# -------------------------- pure-JAX reference ------------------------------

def _reference_forward(x_nchw, params, stride):
    dn = ("NCHW", "OIHW", "NCHW")

    def conv(x, w, s, pad):
        return jax.lax.conv_general_dilated(x, w, (s, s), pad, dimension_numbers=dn)

    def bn(x, g, b, m, v, eps=1e-5):
        scale = (g / jnp.sqrt(v + eps)).reshape(1, -1, 1, 1)
        bias = (b - m * g / jnp.sqrt(v + eps)).reshape(1, -1, 1, 1)
        return x * scale + bias

    out = jax.nn.relu(bn(conv(x_nchw, params["w1"], stride, [(1, 1), (1, 1)]),
                         params["bn1_gamma"], params["bn1_beta"],
                         params["bn1_mean"], params["bn1_var"]))
    out = bn(conv(out, params["w2"], 1, [(1, 1), (1, 1)]),
             params["bn2_gamma"], params["bn2_beta"],
             params["bn2_mean"], params["bn2_var"])
    if "ws" in params:
        sc = bn(conv(x_nchw, params["ws"], stride, [(0, 0), (0, 0)]),
                params["bns_gamma"], params["bns_beta"],
                params["bns_mean"], params["bns_var"])
    else:
        sc = x_nchw
    return jax.nn.relu(out + sc)


# --------------------------------- main --------------------------------------

def _make_params(key, in_planes, block_planes, with_projection):
    ks = jax.random.split(key, 12)
    params = {
        "w1": 0.1 * jax.random.normal(ks[0], (block_planes, in_planes, 3, 3), jnp.float32),
        "w2": 0.1 * jax.random.normal(ks[1], (block_planes, block_planes, 3, 3), jnp.float32),
        "bn1_gamma": jax.random.uniform(ks[2], (block_planes,), jnp.float32, 0.5, 1.5),
        "bn1_beta": 0.1 * jax.random.normal(ks[3], (block_planes,), jnp.float32),
        "bn1_mean": 0.1 * jax.random.normal(ks[4], (block_planes,), jnp.float32),
        "bn1_var": jax.random.uniform(ks[5], (block_planes,), jnp.float32, 0.5, 1.5),
        "bn2_gamma": jax.random.uniform(ks[6], (block_planes,), jnp.float32, 0.5, 1.5),
        "bn2_beta": 0.1 * jax.random.normal(ks[7], (block_planes,), jnp.float32),
        "bn2_mean": 0.1 * jax.random.normal(ks[8], (block_planes,), jnp.float32),
        "bn2_var": jax.random.uniform(ks[9], (block_planes,), jnp.float32, 0.5, 1.5),
    }
    if with_projection:
        ks2 = jax.random.split(ks[10], 5)
        params.update({
            "ws": 0.1 * jax.random.normal(ks2[0], (block_planes, in_planes, 1, 1), jnp.float32),
            "bns_gamma": jax.random.uniform(ks2[1], (block_planes,), jnp.float32, 0.5, 1.5),
            "bns_beta": 0.1 * jax.random.normal(ks2[2], (block_planes,), jnp.float32),
            "bns_mean": 0.1 * jax.random.normal(ks2[3], (block_planes,), jnp.float32),
            "bns_var": jax.random.uniform(ks2[4], (block_planes,), jnp.float32, 0.5, 1.5),
        })
    return params, ks[11]


def _check(x, params, stride, block_planes):
    fwd = jax.jit(basic_block_forward, static_argnums=2)
    out = jax.block_until_ready(fwd(x, params, stride))
    ref = jax.block_until_ready(_reference_forward(x, params, stride))

    N, _, H, W = x.shape
    assert out.shape == (N, block_planes, H // stride, W // stride), out.shape

    out_f32 = out.astype(jnp.float32)
    max_err = float(jnp.max(jnp.abs(out_f32 - ref)))
    mean_err = float(jnp.mean(jnp.abs(out_f32 - ref)))
    # tolerance loosened for bf16 matmul operands / bf16 intermediates
    assert jnp.allclose(out_f32, ref, atol=5e-2, rtol=5e-2), (max_err, mean_err)
    assert mean_err < 5e-3, (max_err, mean_err)


if __name__ == "__main__":
    key = jax.random.PRNGKey(0)

    # 1) projection-shortcut path (stride 2, channel change)
    params_a, key = _make_params(key, in_planes=4, block_planes=8,
                                 with_projection=True)
    x_a = jax.random.normal(key, (2, 4, 16, 16), jnp.float32)
    _check(x_a, params_a, stride=2, block_planes=8)

    # 2) identity-shortcut path (stride 1, same channels)
    params_b, key = _make_params(jax.random.PRNGKey(1), in_planes=8,
                                 block_planes=8, with_projection=False)
    x_b = jax.random.normal(key, (2, 8, 16, 16), jnp.float32)
    _check(x_b, params_b, stride=1, block_planes=8)

    print("KERNEL_OK")
</pallas_src>

<mosaic_0001>
module attributes {stable_mosaic.version = 11 : i64} {
  func.func @_mm_bias_act_kernel(%arg0: i32, %arg1: i32, %arg2: memref<128x128xbf16, #tpu.memory_space<vmem>>, %arg3: memref<128x128xbf16, #tpu.memory_space<vmem>>, %arg4: memref<1x128xf32, #tpu.memory_space<vmem>>, %arg5: memref<128x128xbf16, #tpu.memory_space<vmem>>, %arg6: memref<128x128xf32, #tpu.memory_space<vmem>>) attributes {dimension_semantics = [#tpu.dimension_semantics<parallel>, #tpu.dimension_semantics<arbitrary>], iteration_bounds = array<i64: 1, 1>, scalar_prefetch = 0 : i64, scratch_operands = 1 : i64, tpu.core_type = #tpu.core_type<tc>, window_params = [{transform_indices = @transform_0, window_bounds = array<i64: 128, 128>}, {transform_indices = @transform_1, window_bounds = array<i64: 128, 128>}, {pipeline_mode = #tpu.pipeline_mode<synchronous>, transform_indices = @transform_2, window_bounds = array<i64: 1, 128>}, {transform_indices = @transform_3, window_bounds = array<i64: 128, 128>}]} {
    %c0_i32 = arith.constant 0 : i32
    %0 = arith.cmpi eq, %arg1, %c0_i32 : i32
    %1 = arith.extui %0 : i1 to i32
    %c0_i32_0 = arith.constant 0 : i32
    %2 = arith.cmpi ne, %1, %c0_i32_0 : i32
    scf.if %2 {
      %cst_10 = arith.constant 0.000000e+00 : f32
      %12 = vector.broadcast %cst_10 : f32 to vector<128x128xf32>
      %c0_11 = arith.constant 0 : index
      %c0_12 = arith.constant 0 : index
      %13 = vector.load %arg6[%c0_11, %c0_12] : memref<128x128xf32, #tpu.memory_space<vmem>>, vector<128x128xf32>
      tpu.vector_store %arg6[%c0_11, %c0_12], %12 {strides = array<i32>} : memref<128x128xf32, #tpu.memory_space<vmem>>, vector<128x128xf32>,
    } else {
    }
    %c0 = arith.constant 0 : index
    %c0_1 = arith.constant 0 : index
    %3 = vector.load %arg6[%c0, %c0_1] : memref<128x128xf32, #tpu.memory_space<vmem>>, vector<128x128xf32>
    %c0_2 = arith.constant 0 : index
    %c0_3 = arith.constant 0 : index
    %4 = vector.load %arg2[%c0_2, %c0_3] : memref<128x128xbf16, #tpu.memory_space<vmem>>, vector<128x128xbf16>
    %c0_4 = arith.constant 0 : index
    %c0_5 = arith.constant 0 : index
    %5 = vector.load %arg3[%c0_4, %c0_5] : memref<128x128xbf16, #tpu.memory_space<vmem>>, vector<128x128xbf16>
    %cst = arith.constant dense<0.000000e+00> : vector<128x128xf32>
    %6 = tpu.matmul %4, %5, %cst {dimension_numbers = #tpu.dot_dimension_numbers<[1], [0], [0], [1], [0, 0, 1, 1], [], []>} : vector<128x128xbf16>, vector<128x128xbf16>, vector<128x128xf32> -> vector<128x128xf32>
    %7 = arith.addf %3, %6 : vector<128x128xf32>
    %c0_6 = arith.constant 0 : index
    %c0_7 = arith.constant 0 : index
    %8 = vector.load %arg6[%c0_6, %c0_7] : memref<128x128xf32, #tpu.memory_space<vmem>>, vector<128x128xf32>
    tpu.vector_store %arg6[%c0_6, %c0_7], %7 {strides = array<i32>} : memref<128x128xf32, #tpu.memory_space<vmem>>, vector<128x128xf32>,
    %c0_i32_8 = arith.constant 0 : i32
    %9 = arith.cmpi eq, %arg1, %c0_i32_8 : i32
    %10 = arith.extui %9 : i1 to i32
    %c0_i32_9 = arith.constant 0 : i32
    %11 = arith.cmpi ne, %10, %c0_i32_9 : i32
    scf.if %11 {
      %c0_10 = arith.constant 0 : index
      %c0_11 = arith.constant 0 : index
      %12 = vector.load %arg6[%c0_10, %c0_11] : memref<128x128xf32, #tpu.memory_space<vmem>>, vector<128x128xf32>
      %c0_12 = arith.constant 0 : index
      %c0_13 = arith.constant 0 : index
      %13 = vector.load %arg4[%c0_12, %c0_13] : memref<1x128xf32, #tpu.memory_space<vmem>>, vector<1x128xf32>
      %14 = vector.broadcast %13 : vector<1x128xf32> to vector<128x128xf32>
      %15 = arith.addf %12, %14 : vector<128x128xf32>
      %cst_14 = arith.constant 0.000000e+00 : f32
      %16 = vector.broadcast %cst_14 : f32 to vector<128x128xf32>
      %17 = arith.maximumf %15, %16 : vector<128x128xf32>
      %18 = arith.truncf %17 : vector<128x128xf32> to vector<128x128xbf16>
      %c0_15 = arith.constant 0 : index
      %c0_16 = arith.constant 0 : index
      %19 = vector.load %arg5[%c0_15, %c0_16] : memref<128x128xbf16, #tpu.memory_space<vmem>>, vector<128x128xbf16>
      tpu.vector_store %arg5[%c0_15, %c0_16], %18 {strides = array<i32>} : memref<128x128xbf16, #tpu.memory_space<vmem>>, vector<128x128xbf16>,
    } else {
    }
    return
  }
  func.func @transform_0(%arg0: i32, %arg1: i32) -> (i32, i32) {
    %c0_i32 = arith.constant 0 : i32
    return %arg0, %arg1 : i32, i32
  }
  func.func @transform_1(%arg0: i32, %arg1: i32) -> (i32, i32) {
    %c0_i32 = arith.constant 0 : i32
    %c0_i32_0 = arith.constant 0 : i32
    return %arg1, %c0_i32 : i32, i32
  }
  func.func @transform_2(%arg0: i32, %arg1: i32) -> (i32, i32) {
    %c0_i32 = arith.constant 0 : i32
    %c0_i32_0 = arith.constant 0 : i32
    %c0_i32_1 = arith.constant 0 : i32
    return %c0_i32, %c0_i32_0 : i32, i32
  }
  func.func @transform_3(%arg0: i32, %arg1: i32) -> (i32, i32) {
    %c0_i32 = arith.constant 0 : i32
    %c0_i32_0 = arith.constant 0 : i32
    return %arg0, %c0_i32 : i32, i32
  }
}

</mosaic_0001>

<llo_original>
// kernel: basic_block_forward.2
$region0: #{basic_block_forward.2}
  #allocation0 [shape = 'u32[]', space=smem, size = 0x4, offset = 0x4, fixed_abs, tag = 'smem constant byte address 0x4 - core index']
  #allocation1 [shape = 'u32[144,128]{1,0:T(1,128)}', space=vmem, size = 0x12000, scoped, tag = 'internal scratch']
  #allocation2 [shape = 'f32[128,128]{1,0:T(8,128)}', space=vmem, size = 0x10000, scoped, tag = 'scratch operand']
  %s0 = inlined_call_operand.vmem [shape: bf16[128,128], index: 0, kind: input, shape index: {}]
  %s1 = inlined_call_operand.vmem [shape: bf16[128,128], index: 1, kind: input, shape index: {}]
  %s2 = inlined_call_operand.vmem [shape: f32[1,128], index: 2, kind: input, shape index: {}]
  %s3 = inlined_call_operand.vmem [shape: bf16[128,128], index: 3, kind: output, shape index: {}]
  %s4 = sld [smem:[#allocation0]]
  $region30: #{basic_block_forward.2} parent=0
    _
  %s6 = ssub.s32 1, %s4
  %s7 = scalar_select 0, %s6, %s4
  // Predicated region
  $region2: #{basic_block_forward.2} parent=0 // pred_check
    _
  $region3: #{basic_block_forward.2} parent=0 // pred_check_branch
    %9 = sbr.rel (0) target = $region5
  $region4: #{basic_block_forward.2} parent=0 // pred_region
    _
  $region5: #{basic_block_forward.2} parent=0 // pred_fallthru
    _
  // Predicated region
  $region6: #{basic_block_forward.2} parent=0 // pred_check
    _
  $region7: #{basic_block_forward.2} parent=0 // pred_check_branch
    %11 = sbr.rel (0) target = $region9
  $region8: #{basic_block_forward.2} parent=0 // pred_region
    _
  $region9: #{basic_block_forward.2} parent=0 // pred_fallthru
    _
  // Predicated region
  $region10: #{basic_block_forward.2} parent=0 // pred_check
    _
  $region11: #{basic_block_forward.2} parent=0 // pred_check_branch
    %13 = sbr.rel (0) target = $region13
  $region12: #{basic_block_forward.2} parent=0 // pred_region
    _
  $region13: #{basic_block_forward.2} parent=0 // pred_fallthru
    _
  %p15 = scmp.eq.s32.totalorder 0, 0
  // Predicated region
  $region14: #{basic_block_forward.2} parent=0 // pred_check
    %p16 = pneg %p15
  $region15: #{basic_block_forward.2} parent=0 // pred_check_branch
    %18 = sbr.rel (%p16) target = $region17
  $region16: #{basic_block_forward.2} parent=0 // pred_region
    %19 = vst [vmem:[#allocation2] sm:$0xff] 0.0
    %20 = vst [vmem:[#allocation2 + $0x8] sm:$0xff] 0.0
    %21 = vst [vmem:[#allocation2 + $0x10] sm:$0xff] 0.0
    %22 = vst [vmem:[#allocation2 + $0x18] sm:$0xff] 0.0
    %23 = vst [vmem:[#allocation2 + $0x20] sm:$0xff] 0.0
    %24 = vst [vmem:[#allocation2 + $0x28] sm:$0xff] 0.0
    %25 = vst [vmem:[#allocation2 + $0x30] sm:$0xff] 0.0
    %26 = vst [vmem:[#allocation2 + $0x38] sm:$0xff] 0.0
    %27 = vst [vmem:[#allocation2 + $0x40] sm:$0xff] 0.0
    %28 = vst [vmem:[#allocation2 + $0x48] sm:$0xff] 0.0
    %29 = vst [vmem:[#allocation2 + $0x50] sm:$0xff] 0.0
    %30 = vst [vmem:[#allocation2 + $0x58] sm:$0xff] 0.0
    %31 = vst [vmem:[#allocation2 + $0x60] sm:$0xff] 0.0
    %32 = vst [vmem:[#allocation2 + $0x68] sm:$0xff] 0.0
    %33 = vst [vmem:[#allocation2 + $0x70] sm:$0xff] 0.0
    %34 = vst [vmem:[#allocation2 + $0x78] sm:$0xff] 0.0
  $region17: #{basic_block_forward.2} parent=0 // pred_fallthru
    _
  %v35 = vld [vmem:[#allocation2] sm:$0xff]
  %v36 = vld [vmem:[#allocation2 + $0x8] sm:$0xff]
  %v37 = vld [vmem:[#allocation2 + $0x10] sm:$0xff]
  %v38 = vld [vmem:[#allocation2 + $0x18] sm:$0xff]
  %v39 = vld [vmem:[#allocation2 + $0x20] sm:$0xff]
  %v40 = vld [vmem:[#allocation2 + $0x28] sm:$0xff]
  %v41 = vld [vmem:[#allocation2 + $0x30] sm:$0xff]
  %v42 = vld [vmem:[#allocation2 + $0x38] sm:$0xff]
  %v43 = vld [vmem:[#allocation2 + $0x40] sm:$0xff]
  %v44 = vld [vmem:[#allocation2 + $0x48] sm:$0xff]
  %v45 = vld [vmem:[#allocation2 + $0x50] sm:$0xff]
  %v46 = vld [vmem:[#allocation2 + $0x58] sm:$0xff]
  %v47 = vld [vmem:[#allocation2 + $0x60] sm:$0xff]
  %v48 = vld [vmem:[#allocation2 + $0x68] sm:$0xff]
  %v49 = vld [vmem:[#allocation2 + $0x70] sm:$0xff]
  %v50 = vld [vmem:[#allocation2 + $0x78] sm:$0xff]
  %v51 = vld [vmem:[%s0] sm:$0xf]
  %v52 = vld [vmem:[%s0 + $0x4] sm:$0xf]
  %v53 = vld [vmem:[%s0 + $0x8] sm:$0xf]
  %v54 = vld [vmem:[%s0 + $0xc] sm:$0xf]
  %v55 = vld [vmem:[%s0 + $0x10] sm:$0xf]
  %v56 = vld [vmem:[%s0 + $0x14] sm:$0xf]
  %v57 = vld [vmem:[%s0 + $0x18] sm:$0xf]
  %v58 = vld [vmem:[%s0 + $0x1c] sm:$0xf]
  %v59 = vld [vmem:[%s0 + $0x20] sm:$0xf]
  %v60 = vld [vmem:[%s0 + $0x24] sm:$0xf]
  %v61 = vld [vmem:[%s0 + $0x28] sm:$0xf]
  %v62 = vld [vmem:[%s0 + $0x2c] sm:$0xf]
  %v63 = vld [vmem:[%s0 + $0x30] sm:$0xf]
  %v64 = vld [vmem:[%s0 + $0x34] sm:$0xf]
  %v65 = vld [vmem:[%s0 + $0x38] sm:$0xf]
  %v66 = vld [vmem:[%s0 + $0x3c] sm:$0xf]
  %v67 = vld [vmem:[%s1] sm:$0xf]
  %v68 = vld [vmem:[%s1 + $0x4] sm:$0xf]
  %v69 = vld [vmem:[%s1 + $0x8] sm:$0xf]
  %v70 = vld [vmem:[%s1 + $0xc] sm:$0xf]
  %v71 = vld [vmem:[%s1 + $0x10] sm:$0xf]
  %v72 = vld [vmem:[%s1 + $0x14] sm:$0xf]
  %v73 = vld [vmem:[%s1 + $0x18] sm:$0xf]
  %v74 = vld [vmem:[%s1 + $0x1c] sm:$0xf]
  %v75 = vld [vmem:[%s1 + $0x20] sm:$0xf]
  %v76 = vld [vmem:[%s1 + $0x24] sm:$0xf]
  %v77 = vld [vmem:[%s1 + $0x28] sm:$0xf]
  %v78 = vld [vmem:[%s1 + $0x2c] sm:$0xf]
  %v79 = vld [vmem:[%s1 + $0x30] sm:$0xf]
  %v80 = vld [vmem:[%s1 + $0x34] sm:$0xf]
  %v81 = vld [vmem:[%s1 + $0x38] sm:$0xf]
  %v82 = vld [vmem:[%s1 + $0x3c] sm:$0xf]
  %v99 = vunpack.c.l.b16 %v51
  %v100 = vunpack.c.l.b16 %v52
  %v101 = vunpack.c.l.b16 %v53
  %v102 = vunpack.c.l.b16 %v54
  %v103 = vunpack.c.l.b16 %v55
  %v104 = vunpack.c.l.b16 %v56
  %v105 = vunpack.c.l.b16 %v57
  %v106 = vunpack.c.l.b16 %v58
  %v107 = vunpack.c.l.b16 %v59
  %v108 = vunpack.c.l.b16 %v60
  %v109 = vunpack.c.l.b16 %v61
  %v110 = vunpack.c.l.b16 %v62
  %v111 = vunpack.c.l.b16 %v63
  %v112 = vunpack.c.l.b16 %v64
  %v113 = vunpack.c.l.b16 %v65
  %v114 = vunpack.c.l.b16 %v66
  %v115 = vpack.c.b16 %v100, %v99
  %v116 = vpack.c.b16 %v102, %v101
  %v117 = vpack.c.b16 %v104, %v103
  %v118 = vpack.c.b16 %v106, %v105
  %v119 = vpack.c.b16 %v108, %v107
  %v120 = vpack.c.b16 %v110, %v109
  %v121 = vpack.c.b16 %v112, %v111
  %v122 = vpack.c.b16 %v114, %v113
  %v147 = vunpack.c.l.b16 %v67
  %v148 = vunpack.c.l.b16 %v68
  %v149 = vunpack.c.l.b16 %v69
  %v150 = vunpack.c.l.b16 %v70
  %v151 = vunpack.c.l.b16 %v71
  %v152 = vunpack.c.l.b16 %v72
  %v153 = vunpack.c.l.b16 %v73
  %v154 = vunpack.c.l.b16 %v74
  %v155 = vunpack.c.l.b16 %v75
  %v156 = vunpack.c.l.b16 %v76
  %v157 = vunpack.c.l.b16 %v77
  %v158 = vunpack.c.l.b16 %v78
  %v159 = vunpack.c.l.b16 %v79
  %v160 = vunpack.c.l.b16 %v80
  %v161 = vunpack.c.l.b16 %v81
  %v162 = vunpack.c.l.b16 %v82
  %v163 = vpack.c.b16 %v148, %v147
  %v164 = vpack.c.b16 %v150, %v149
  %v165 = vpack.c.b16 %v152, %v151
  %v166 = vpack.c.b16 %v154, %v153
  %v167 = vpack.c.b16 %v156, %v155
  %v168 = vpack.c.b16 %v158, %v157
  %v169 = vpack.c.b16 %v160, %v159
  %v170 = vpack.c.b16 %v162, %v161
  %179 = vmatprep.subr.bf16.mxu0 0
  %180 = vmatpush1.bf16.msra.mxu0 %v163
  %181 = vmatprep.subr.bf16.mxu0 0
  %182 = vmatpush1.bf16.msra.mxu0 %v164
  %183 = vmatprep.subr.bf16.mxu0 0
  %184 = vmatpush1.bf16.msra.mxu0 %v165
  %185 = vmatprep.subr.bf16.mxu0 0
  %186 = vmatpush1.bf16.msra.mxu0 %v166
  %187 = vmatprep.subr.bf16.mxu0 0
  %188 = vmatpush1.bf16.msra.mxu0 %v167
  %189 = vmatprep.subr.bf16.mxu0 0
  %190 = vmatpush1.bf16.msra.mxu0 %v168
  %191 = vmatprep.subr.bf16.mxu0 0
  %192 = vmatpush1.bf16.msra.mxu0 %v169
  %193 = vmatprep.subr.bf16.mxu0 0
  %194 = vmatpush1.bf16.msra.mxu0 %v170
  %195 = vmatprep.subr.bf16.mxu0 0
  %196 = vmatpush1.bf16.msra.mxu0 0
  %197 = vmatprep.subr.bf16.mxu0 0
  %198 = vmatpush1.bf16.msra.mxu0 0
  %199 = vmatprep.subr.bf16.mxu0 0
  %200 = vmatpush1.bf16.msra.mxu0 0
  %201 = vmatprep.subr.bf16.mxu0 0
  %202 = vmatpush1.bf16.msra.mxu0 0
  %203 = vmatprep.subr.bf16.mxu0 0
  %204 = vmatpush1.bf16.msra.mxu0 0
  %205 = vmatprep.subr.bf16.mxu0 0
  %206 = vmatpush1.bf16.msra.mxu0 0
  %207 = vmatprep.subr.bf16.mxu0 0
  %208 = vmatpush1.bf16.msra.mxu0 0
  %209 = vmatprep.subr.bf16.mxu0 0
  %210 = vmatpush1.bf16.msra.mxu0 0
  %211 = vmatprep.mubr.bf16.mxu0 0
  %212 = vmatmul.mubr.bf16.gmra.mrb[0].mxu0 %v115
  %v213 = vpop.f32.mrb[0].mxu0
  %v214 = vadd.f32 0.0, %v213
  %v215 = vpop.f32.mrb[0].mxu0
  %v216 = vpop.f32.mrb[0].mxu0
  %v217 = vadd.f32 0.0, %v216
  %v218 = vpop.f32.mrb[0].mxu0
  %219 = vmatprep.mubr.bf16.mxu0 0
  %220 = vmatmul.mubr.bf16.gmra.mrb[0].mxu0 %v116
  %v221 = vpop.f32.mrb[0].mxu0
  %v222 = vadd.f32 0.0, %v221
  %v223 = vpop.f32.mrb[0].mxu0
  %v224 = vpop.f32.mrb[0].mxu0
  %v225 = vadd.f32 0.0, %v224
  %v226 = vpop.f32.mrb[0].mxu0
  %227 = vmatprep.mubr.bf16.mxu0 0
  %228 = vmatmul.mubr.bf16.gmra.mrb[0].mxu0 %v117
  %v229 = vpop.f32.mrb[0].mxu0
  %v230 = vadd.f32 0.0, %v229
  %v231 = vpop.f32.mrb[0].mxu0
  %v232 = vpop.f32.mrb[0].mxu0
  %v233 = vadd.f32 0.0, %v232
  %v234 = vpop.f32.mrb[0].mxu0
  %235 = vmatprep.mubr.bf16.mxu0 0
  %236 = vmatmul.mubr.bf16.gmra.mrb[0].mxu0 %v118
  %v237 = vpop.f32.mrb[0].mxu0
  %v238 = vadd.f32 0.0, %v237
  %v239 = vpop.f32.mrb[0].mxu0
  %v240 = vpop.f32.mrb[0].mxu0
  %v241 = vadd.f32 0.0, %v240
  %v242 = vpop.f32.mrb[0].mxu0
  %243 = vmatprep.mubr.bf16.mxu0 0
  %244 = vmatmul.mubr.bf16.gmra.mrb[0].mxu0 %v119
  %v245 = vpop.f32.mrb[0].mxu0
  %v246 = vadd.f32 0.0, %v245
  %v247 = vpop.f32.mrb[0].mxu0
  %v248 = vpop.f32.mrb[0].mxu0
  %v249 = vadd.f32 0.0, %v248
  %v250 = vpop.f32.mrb[0].mxu0
  %251 = vmatprep.mubr.bf16.mxu0 0
  %252 = vmatmul.mubr.bf16.gmra.mrb[0].mxu0 %v120
  %v253 = vpop.f32.mrb[0].mxu0
  %v254 = vadd.f32 0.0, %v253
  %v255 = vpop.f32.mrb[0].mxu0
  %v256 = vpop.f32.mrb[0].mxu0
  %v257 = vadd.f32 0.0, %v256
  %v258 = vpop.f32.mrb[0].mxu0
  %259 = vmatprep.mubr.bf16.mxu0 0
  %260 = vmatmul.mubr.bf16.gmra.mrb[0].mxu0 %v121
  %v261 = vpop.f32.mrb[0].mxu0
  %v262 = vadd.f32 0.0, %v261
  %v263 = vpop.f32.mrb[0].mxu0
  %v264 = vpop.f32.mrb[0].mxu0
  %v265 = vadd.f32 0.0, %v264
  %v266 = vpop.f32.mrb[0].mxu0
  %267 = vmatprep.mubr.bf16.mxu0 0
  %268 = vmatmul.mubr.bf16.gmra.mrb[0].mxu0 %v122
  %v269 = vpop.f32.mrb[0].mxu0
  %v270 = vadd.f32 0.0, %v269
  %v271 = vpop.f32.mrb[0].mxu0
  %v272 = vpop.f32.mrb[0].mxu0
  %v273 = vadd.f32 0.0, %v272
  %v274 = vpop.f32.mrb[0].mxu0
  %275 = vdwg.mxu0
  %v276 = vadd.f32 %v35, %v214
  %v277 = vadd.f32 %v36, %v217
  %v278 = vadd.f32 %v37, %v222
  %v279 = vadd.f32 %v38, %v225
  %v280 = vadd.f32 %v39, %v230
  %v281 = vadd.f32 %v40, %v233
  %v282 = vadd.f32 %v41, %v238
  %v283 = vadd.f32 %v42, %v241
  %v284 = vadd.f32 %v43, %v246
  %v285 = vadd.f32 %v44, %v249
  %v286 = vadd.f32 %v45, %v254
  %v287 = vadd.f32 %v46, %v257
  %v288 = vadd.f32 %v47, %v262
  %v289 = vadd.f32 %v48, %v265
  %v290 = vadd.f32 %v49, %v270
  %v291 = vadd.f32 %v50, %v273
  %292 = vst [vmem:[#allocation2] sm:$0xff] %v276
  %293 = vst [vmem:[#allocation2 + $0x8] sm:$0xff] %v277
  %294 = vst [vmem:[#allocation2 + $0x10] sm:$0xff] %v278
  %295 = vst [vmem:[#allocation2 + $0x18] sm:$0xff] %v279
  %296 = vst [vmem:[#allocation2 + $0x20] sm:$0xff] %v280
  %297 = vst [vmem:[#allocation2 + $0x28] sm:$0xff] %v281
  %298 = vst [vmem:[#allocation2 + $0x30] sm:$0xff] %v282
  %299 = vst [vmem:[#allocation2 + $0x38] sm:$0xff] %v283
  %300 = vst [vmem:[#allocation2 + $0x40] sm:$0xff] %v284
  %301 = vst [vmem:[#allocation2 + $0x48] sm:$0xff] %v285
  %302 = vst [vmem:[#allocation2 + $0x50] sm:$0xff] %v286
  %303 = vst [vmem:[#allocation2 + $0x58] sm:$0xff] %v287
  %304 = vst [vmem:[#allocation2 + $0x60] sm:$0xff] %v288
  %305 = vst [vmem:[#allocation2 + $0x68] sm:$0xff] %v289
  %306 = vst [vmem:[#allocation2 + $0x70] sm:$0xff] %v290
  %307 = vst [vmem:[#allocation2 + $0x78] sm:$0xff] %v291
  // Predicated region
  $region18: #{basic_block_forward.2} parent=0 // pred_check
    %p308 = pneg %p15
  $region19: #{basic_block_forward.2} parent=0 // pred_check_branch
    %310 = sbr.rel (%p308) target = $region21
  $region20: #{basic_block_forward.2} parent=0 // pred_region
    %v311 = vld [vmem:[#allocation2] sm:$0xff]
    %v312 = vld [vmem:[#allocation2 + $0x8] sm:$0xff]
    %v313 = vld [vmem:[#allocation2 + $0x10] sm:$0xff]
    %v314 = vld [vmem:[#allocation2 + $0x18] sm:$0xff]
    %v315 = vld [vmem:[#allocation2 + $0x20] sm:$0xff]
    %v316 = vld [vmem:[#allocation2 + $0x28] sm:$0xff]
    %v317 = vld [vmem:[#allocation2 + $0x30] sm:$0xff]
    %v318 = vld [vmem:[#allocation2 + $0x38] sm:$0xff]
    %v319 = vld [vmem:[#allocation2 + $0x40] sm:$0xff]
    %v320 = vld [vmem:[#allocation2 + $0x48] sm:$0xff]
    %v321 = vld [vmem:[#allocation2 + $0x50] sm:$0xff]
    %v322 = vld [vmem:[#allocation2 + $0x58] sm:$0xff]
    %v323 = vld [vmem:[#allocation2 + $0x60] sm:$0xff]
    %v324 = vld [vmem:[#allocation2 + $0x68] sm:$0xff]
    %v325 = vld [vmem:[#allocation2 + $0x70] sm:$0xff]
    %v326 = vld [vmem:[#allocation2 + $0x78] sm:$0xff]
    %v327 = vld [vmem:[%s2] sm:$0x1]
    %v329 = vlaneseq
    %v330 = vshrl.u32 %v329, 7
    %v331 = vsub.s32 0, %v330
    %v332 = vrot.slane %v327, %v331
    %v334 = vadd.f32 %v311, %v332
    %v335 = vadd.f32 %v312, %v332
    %v336 = vadd.f32 %v313, %v332
    %v337 = vadd.f32 %v314, %v332
    %v338 = vadd.f32 %v315, %v332
    %v339 = vadd.f32 %v316, %v332
    %v340 = vadd.f32 %v317, %v332
    %v341 = vadd.f32 %v318, %v332
    %v342 = vadd.f32 %v319, %v332
    %v343 = vadd.f32 %v320, %v332
    %v344 = vadd.f32 %v321, %v332
    %v345 = vadd.f32 %v322, %v332
    %v346 = vadd.f32 %v323, %v332
    %v347 = vadd.f32 %v324, %v332
    %v348 = vadd.f32 %v325, %v332
    %v349 = vadd.f32 %v326, %v332
    %v350 = vmax.f32 %v334, 0.0
    %v351 = vmax.f32 %v335, 0.0
    %v352 = vmax.f32 %v336, 0.0
    %v353 = vmax.f32 %v337, 0.0
    %v354 = vmax.f32 %v338, 0.0
    %v355 = vmax.f32 %v339, 0.0
    %v356 = vmax.f32 %v340, 0.0
    %v357 = vmax.f32 %v341, 0.0
    %v358 = vmax.f32 %v342, 0.0
    %v359 = vmax.f32 %v343, 0.0
    %v360 = vmax.f32 %v344, 0.0
    %v361 = vmax.f32 %v345, 0.0
    %v362 = vmax.f32 %v346, 0.0
    %v363 = vmax.f32 %v347, 0.0
    %v364 = vmax.f32 %v348, 0.0
    %v365 = vmax.f32 %v349, 0.0
    %v366 = vpack.c.bf16 %v351, %v350
    %v367 = vpack.c.bf16 %v353, %v352
    %v368 = vpack.c.bf16 %v355, %v354
    %v369 = vpack.c.bf16 %v357, %v356
    %v370 = vpack.c.bf16 %v359, %v358
    %v371 = vpack.c.bf16 %v361, %v360
    %v372 = vpack.c.bf16 %v363, %v362
    %v373 = vpack.c.bf16 %v365, %v364
    %v382 = vunpack.c.l.b16 %v366
    %v383 = vunpack.c.h.b16 %v366
    %v384 = vunpack.c.l.b16 %v367
    %v385 = vunpack.c.h.b16 %v367
    %v386 = vunpack.c.l.b16 %v368
    %v387 = vunpack.c.h.b16 %v368
    %v388 = vunpack.c.l.b16 %v369
    %v389 = vunpack.c.h.b16 %v369
    %v390 = vunpack.c.l.b16 %v370
    %v391 = vunpack.c.h.b16 %v370
    %v392 = vunpack.c.l.b16 %v371
    %v393 = vunpack.c.h.b16 %v371
    %v394 = vunpack.c.l.b16 %v372
    %v395 = vunpack.c.h.b16 %v372
    %v396 = vunpack.c.l.b16 %v373
    %v397 = vunpack.c.h.b16 %v373
    %v398 = vpack.c.b16 %v382, %v382
    %v399 = vpack.c.b16 %v383, %v383
    %v400 = vpack.c.b16 %v384, %v384
    %v401 = vpack.c.b16 %v385, %v385
    %v402 = vpack.c.b16 %v386, %v386
    %v403 = vpack.c.b16 %v387, %v387
    %v404 = vpack.c.b16 %v388, %v388
    %v405 = vpack.c.b16 %v389, %v389
    %v406 = vpack.c.b16 %v390, %v390
    %v407 = vpack.c.b16 %v391, %v391
    %v408 = vpack.c.b16 %v392, %v392
    %v409 = vpack.c.b16 %v393, %v393
    %v410 = vpack.c.b16 %v394, %v394
    %v411 = vpack.c.b16 %v395, %v395
    %v412 = vpack.c.b16 %v396, %v396
    %v413 = vpack.c.b16 %v397, %v397
    %430 = vst [vmem:[%s3] sm:$0xf] %v398
    %431 = vst [vmem:[%s3 + $0x4] sm:$0xf] %v399
    %432 = vst [vmem:[%s3 + $0x8] sm:$0xf] %v400
    %433 = vst [vmem:[%s3 + $0xc] sm:$0xf] %v401
    %434 = vst [vmem:[%s3 + $0x10] sm:$0xf] %v402
    %435 = vst [vmem:[%s3 + $0x14] sm:$0xf] %v403
    %436 = vst [vmem:[%s3 + $0x18] sm:$0xf] %v404
    %437 = vst [vmem:[%s3 + $0x1c] sm:$0xf] %v405
    %438 = vst [vmem:[%s3 + $0x20] sm:$0xf] %v406
    %439 = vst [vmem:[%s3 + $0x24] sm:$0xf] %v407
    %440 = vst [vmem:[%s3 + $0x28] sm:$0xf] %v408
    %441 = vst [vmem:[%s3 + $0x2c] sm:$0xf] %v409
    %442 = vst [vmem:[%s3 + $0x30] sm:$0xf] %v410
    %443 = vst [vmem:[%s3 + $0x34] sm:$0xf] %v411
    %444 = vst [vmem:[%s3 + $0x38] sm:$0xf] %v412
    %445 = vst [vmem:[%s3 + $0x3c] sm:$0xf] %v413
  $region21: #{basic_block_forward.2} parent=0 // pred_fallthru
    _
  // Predicated region
  $region22: #{basic_block_forward.2} parent=0 // pred_check
    _
  $region23: #{basic_block_forward.2} parent=0 // pred_check_branch
    %447 = sbr.rel (0) target = $region25
  $region24: #{basic_block_forward.2} parent=0 // pred_region
    _
  $region25: #{basic_block_forward.2} parent=0 // pred_fallthru
    _
  // Predicated region
  $region26: #{basic_block_forward.2} parent=0 // pred_check
    _
  $region27: #{basic_block_forward.2} parent=0 // pred_check_branch
    %449 = sbr.rel (0) target = $region29
  $region28: #{basic_block_forward.2} parent=0 // pred_region
    _
  $region29: #{basic_block_forward.2} parent=0 // pred_fallthru
    _

</llo_original>
